<compile_context>
chip_gen: v7x
topology: tpu7x:2x2x1
jax: 0.10.0
libtpu: 0.0.40
codegen_flags: <defaults>
</compile_context>

<pallas_src>
import functools

import jax
import jax.numpy as jnp
import numpy as np
from jax import lax
from jax.experimental import pallas as pl
from jax.experimental.pallas import tpu as pltpu


def _round_up(x, m):
    return (x + m - 1) // m * m


def _vmem_capacity_bytes():
    try:
        info = pltpu.get_tpu_info()
        cap = int(getattr(info, "vmem_capacity_bytes", 0) or 0)
        if cap > 0:
            return cap
    except Exception:
        pass
    return 64 * 2 ** 20  # conservative fallback (v7x per-TC VMEM)


def _pick_tile(O_pad, H_pad, W_pad, B_sub, mxb, vmem_cap, out_tile):
    """Choose the streamed outer-dim tile so double-buffered weights fit VMEM."""
    to_max = 1024 if vmem_cap >= 100 * 2 ** 20 else 512  # v5e/v6e: larger DMAs; v7x: 512
    if out_tile is not None:
        to_max = max(128, _round_up(out_tile, 128))
    TO = min(O_pad, to_max)

    def est(t):
        return (2 * (H_pad + W_pad) * t * mxb        # W1h / W1w tiles, double-buffered
                + 2 * 2 * t * 4                      # b1 / w2 tiles, double-buffered
                + 2 * B_sub * (H_pad + W_pad) * mxb  # ph + workers buffers
                + B_sub * t * 4                      # h temporary
                + 8 * B_sub * 4 + (1 << 14))         # preds/labels/acc + slack

    budget = int(0.55 * vmem_cap)
    while TO > 128 and est(TO) > budget:
        TO -= 128
    # Snap TO down to a 128-multiple that divides O_pad exactly (no partial tiles).
    m = O_pad // 128
    k = max(TO // 128, 1)
    while m % k:
        k -= 1
    TO = k * 128
    return TO, est(TO)


def _pew_kernel(ph_ref, wrk_ref, w1h_ref, w1w_ref, b1_ref, w2_ref, b2_ref, lab_ref,
                preds_ref, losssq_ref, pred_acc, *, batch):
    i = pl.program_id(0)          # LLM head index (parallel axis; no cross-head state)
    j = pl.program_id(1)          # outer_dim tile index (reduction axis for scalar head)
    nj = pl.num_programs(1)

    @pl.when(j == 0)
    def _init():
        pred_acc[...] = jnp.zeros_like(pred_acc)

    # Shared-hidden GEMM (streams only W1 tiles) + tiny workers correction
    # (contraction dim padded to the sublane minimum, not 128).  f32 accumulation.
    h = jnp.dot(ph_ref[...], w1h_ref[...], preferred_element_type=jnp.float32)
    h = h + jnp.dot(wrk_ref[...], w1w_ref[...], preferred_element_type=jnp.float32)
    h = jnp.maximum(h + b1_ref[...], 0.0)                        # (B_sub, TO) f32

    # Natural-orientation scalar head: (B_sub, TO) @ (TO, 1) -> (B_sub, 1); no
    # per-step transposed operand.
    pred_acc[...] += jnp.dot(h, w2_ref[...], preferred_element_type=jnp.float32)

    @pl.when(j == nj - 1)
    def _finish():
        pred = pred_acc[...] + b2_ref[i]                         # (B_sub, 1)
        preds_ref[...] = pred                                    # padded rows = garbage, sliced off
        diff = pred - lab_ref[...]                               # labels already logit-transformed
        row = lax.broadcasted_iota(jnp.int32, pred.shape, 0)
        diff = jnp.where(row < batch, diff, 0.0)                 # mask batch padding
        losssq_ref[...] = jnp.sum(diff * diff, keepdims=True)    # per-head SSE -> (1, 1)


def pack_params(params, *, hidden_size, mx_dtype=jnp.bfloat16):
    """One-time weight packing (hoisted out of the per-call path). Cast before padding."""
    # TODO(synk): on v7x, W1h could be packed as fp8 (f32 accumulation) to halve the
    # dominant weight stream again; kept bf16/f32 here for accuracy/portability.
    W1, b1, w2, b2 = params
    nllms, inner, outer = W1.shape
    H = hidden_size
    nw = inner - H
    mxb = jnp.dtype(mx_dtype).itemsize
    sub = 32 // mxb                                   # sublane minimum: 8 (f32) / 16 (bf16)
    H_pad = _round_up(H, 128)
    W_pad = _round_up(max(nw, 1), sub)                # workers contraction dim: NOT 128
    O_pad = _round_up(outer, 128)

    W1m = W1.astype(mx_dtype)
    W1h = jnp.zeros((nllms, H_pad, O_pad), mx_dtype).at[:, :H, :outer].set(W1m[:, :H, :])
    W1w = jnp.zeros((nllms, W_pad, O_pad), mx_dtype).at[:, :nw, :outer].set(W1m[:, H:, :])
    b1p = jnp.zeros((nllms, 1, O_pad), jnp.float32).at[:, 0, :outer].set(b1.astype(jnp.float32))
    w2c = jnp.zeros((nllms, O_pad, 1), jnp.float32).at[:, :outer, 0].set(w2.astype(jnp.float32))
    b2f = b2.reshape(nllms).astype(jnp.float32)
    meta = dict(H=H, nw=nw, outer=outer, nllms=nllms, H_pad=H_pad, W_pad=W_pad,
                O_pad=O_pad, mx_dtype=jnp.dtype(mx_dtype))
    return dict(W1h=W1h, W1w=W1w, b1=b1p, w2=w2c, b2=b2f, meta=meta)


def pew_forward(pred_hidden, workers, labels, packed, *, out_tile=None):
    """pred_hidden: (B, H); workers: (B, nllms, nllms-1); labels: (B, nllms)."""
    meta = packed["meta"]
    H, nw, outer, nllms = meta["H"], meta["nw"], meta["outer"], meta["nllms"]
    H_pad, W_pad, O_pad = meta["H_pad"], meta["W_pad"], meta["O_pad"]
    mx_dtype = meta["mx_dtype"]
    mxb = jnp.dtype(mx_dtype).itemsize
    f32 = jnp.float32

    B = pred_hidden.shape[0]
    assert pred_hidden.shape[1] == H and labels.shape == (B, nllms)

    # Batch padded only to the sublane minimum; preds output is tiny so no 128-lane pad.
    B_sub = _round_up(B, 32 // mxb)

    vmem_cap = _vmem_capacity_bytes()
    TO, est = _pick_tile(O_pad, H_pad, W_pad, B_sub, mxb, vmem_cap, out_tile)
    n_to = O_pad // TO
    vmem_limit = int(min(int(0.75 * vmem_cap), max(32 * 2 ** 20, 2 * est)))

    # Activations: shared hidden (VMEM-resident across the whole grid), workers (LLM-major,
    # logit-transformed), labels (logit transform hoisted here; padding masked in kernel).
    # NOTE: workers/labels must lie strictly in (0,1) (same assumption as the reference).
    ph = jnp.zeros((B_sub, H_pad), mx_dtype).at[:B, :H].set(pred_hidden.astype(mx_dtype))
    workers_t = jnp.log(workers) - jnp.log1p(-workers)
    wrk = jnp.zeros((nllms, B_sub, W_pad), mx_dtype).at[:, :B, :nw].set(
        jnp.transpose(workers_t, (1, 0, 2)).astype(mx_dtype))
    labels_t = jnp.log(labels) - jnp.log1p(-labels)
    lab = jnp.zeros((nllms, B_sub, 1), f32).at[:, :B, 0].set(
        jnp.transpose(labels_t, (1, 0)).astype(f32))

    kernel = functools.partial(_pew_kernel, batch=B)

    flops = 2 * B * (H + nw + 1) * outer * nllms
    bytes_accessed = int(packed["W1h"].nbytes + packed["W1w"].nbytes
                         + packed["b1"].nbytes + packed["w2"].nbytes
                         + ph.nbytes + wrk.nbytes + lab.nbytes
                         + nllms * (B_sub + 1) * 4)

    grid_spec = pltpu.PrefetchScalarGridSpec(
        num_scalar_prefetch=0,
        grid=(nllms, n_to),
        in_specs=[
            pl.BlockSpec((B_sub, H_pad), lambda i, j: (0, 0)),            # pred_hidden (resident)
            pl.BlockSpec((None, B_sub, W_pad), lambda i, j: (i, 0, 0)),   # logit(workers)
            pl.BlockSpec((None, H_pad, TO), lambda i, j: (i, 0, j)),      # W1 hidden part (streamed)
            pl.BlockSpec((None, W_pad, TO), lambda i, j: (i, 0, j)),      # W1 workers part (streamed)
            pl.BlockSpec((None, 1, TO), lambda i, j: (i, 0, j)),          # b1
            pl.BlockSpec((None, TO, 1), lambda i, j: (i, j, 0)),          # w2 column
            pl.BlockSpec(memory_space=pltpu.MemorySpace.SMEM),            # b2 scalars
            pl.BlockSpec((None, B_sub, 1), lambda i, j: (i, 0, 0)),       # logit(labels)
        ],
        out_specs=(
            pl.BlockSpec((None, B_sub, 1), lambda i, j: (i, 0, 0)),       # per-head preds
            pl.BlockSpec((None, 1, 1), lambda i, j: (i, 0, 0)),           # per-head SSE
        ),
        scratch_shapes=[pltpu.VMEM((B_sub, 1), jnp.float32)],             # pred accumulator
    )

    preds_pad, loss_sq = pl.pallas_call(
        kernel,
        out_shape=(jax.ShapeDtypeStruct((nllms, B_sub, 1), jnp.float32),
                   jax.ShapeDtypeStruct((nllms, 1, 1), jnp.float32)),
        grid_spec=grid_spec,
        compiler_params=pltpu.CompilerParams(
            # Heads are independent (per-head outputs, no cross-head SMEM state), so the
            # nllms axis is parallel -> sharded across the two TensorCores on v7x.
            dimension_semantics=("parallel", "arbitrary"),
            vmem_limit_bytes=vmem_limit),
        cost_estimate=pl.CostEstimate(flops=int(flops), transcendentals=0,
                                      bytes_accessed=bytes_accessed),
    )(ph, wrk, packed["W1h"], packed["W1w"], packed["b1"], packed["w2"],
      packed["b2"], lab)

    preds = jnp.transpose(preds_pad[:, :B, 0], (1, 0))          # (B, nllms)
    loss = jnp.sum(loss_sq) / (nllms * B)                       # finish the mean here
    return loss, preds


def init_params(key, nllms, inner_dim, outer_dim):
    """Deterministic synthetic init matching the per-LLM Linear shapes."""
    k0, k1, k2, k3 = jax.random.split(key, 4)
    lim1 = 1.0 / np.sqrt(inner_dim)
    lim2 = 1.0 / np.sqrt(outer_dim)
    W1 = jax.random.uniform(k0, (nllms, inner_dim, outer_dim), jnp.float32, -lim1, lim1)
    b1 = jax.random.uniform(k1, (nllms, outer_dim), jnp.float32, -lim1, lim1)
    w2 = jax.random.uniform(k2, (nllms, outer_dim), jnp.float32, -lim2, lim2)
    b2 = jax.random.uniform(k3, (nllms, 1), jnp.float32, -lim2, lim2)
    return W1, b1, w2, b2


def ref_forward(pred_hidden, workers, labels, params):
    """Pure-JAX reference mirroring the PyTorch 'pew'/'mse' forward."""
    W1, b1, w2, b2 = params
    B, H = pred_hidden.shape
    nllms = labels.shape[1]
    workers_t = -jnp.log(1.0 / workers - 1.0)
    labels_t = -jnp.log(1.0 / labels - 1.0)
    hid = jnp.broadcast_to(pred_hidden[:, None, :], (B, nllms, H))
    x = jnp.concatenate([hid, workers_t], axis=-1)
    preds = []
    for i in range(nllms):
        h = jnp.maximum(x[:, i] @ W1[i] + b1[i], 0.0)
        preds.append(h @ w2[i] + b2[i, 0])
    preds = jnp.stack(preds, axis=1)
    return jnp.mean((preds - labels_t) ** 2), preds


if __name__ == "__main__":
    B, S, H, nllms = 2, 8, 32, 4
    inner_dim = H + nllms - 1          # mode == 'pew'
    outer_dim = inner_dim

    key = jax.random.PRNGKey(0)
    k1, k2, k3, k4 = jax.random.split(key, 4)

    # TODO(synk): the frozen AutoModelForCausalLM backbone is not implemented; a
    # synthetic last-layer hidden_states tensor stands in for outputs.hidden_states[-1].
    hidden_states = jax.random.normal(k1, (B, S, H), jnp.float32)
    lengths = jnp.array([5, 8], dtype=jnp.int32)
    attention_mask = (jnp.arange(S)[None, :] < lengths[:, None]).astype(jnp.int32)

    # insizes = attention_mask.sum(-1) - 1 ; gather last valid token's hidden state
    insizes = attention_mask.sum(axis=-1) - 1
    pred_hidden = jnp.take_along_axis(
        hidden_states, insizes[:, None, None], axis=1)[:, 0, :]          # (B, H)

    workers = jax.random.uniform(k2, (B, nllms, nllms - 1), jnp.float32, 0.05, 0.95)
    labels = jax.random.uniform(k3, (B, nllms), jnp.float32, 0.05, 0.95)

    params = init_params(k4, nllms, inner_dim, outer_dim)
    ref_loss, ref_preds = ref_forward(pred_hidden, workers, labels, params)

    # Exact-ish f32 path (tight tolerance).
    packed_f32 = pack_params(params, hidden_size=H, mx_dtype=jnp.float32)
    loss, preds = pew_forward(pred_hidden, workers, labels, packed_f32)
    loss = jax.block_until_ready(loss)
    np.testing.assert_allclose(np.asarray(loss), np.asarray(ref_loss), rtol=1e-4, atol=1e-4)
    np.testing.assert_allclose(np.asarray(preds), np.asarray(ref_preds), rtol=1e-4, atol=1e-4)

    # Default path: bf16 weights/activations (halves the dominant W1 HBM stream), f32 accum.
    packed_bf16 = pack_params(params, hidden_size=H)           # mx_dtype defaults to bf16
    loss_bf, preds_bf = pew_forward(pred_hidden, workers, labels, packed_bf16)
    loss_bf = jax.block_until_ready(loss_bf)
    np.testing.assert_allclose(np.asarray(loss_bf), np.asarray(ref_loss), rtol=5e-2, atol=5e-2)
    np.testing.assert_allclose(np.asarray(preds_bf), np.asarray(ref_preds), rtol=5e-2, atol=5e-2)

    print("KERNEL_OK")
</pallas_src>

<mosaic_0001>
module attributes {stable_mosaic.version = 11 : i64} {
  func.func @_pew_kernel(%arg0: i32, %arg1: i32, %arg2: memref<8x128xf32, #tpu.memory_space<vmem>>, %arg3: memref<1x8x8xf32, #tpu.memory_space<vmem>>, %arg4: memref<1x128x128xf32, #tpu.memory_space<vmem>>, %arg5: memref<1x8x128xf32, #tpu.memory_space<vmem>>, %arg6: memref<1x1x128xf32, #tpu.memory_space<vmem>>, %arg7: memref<1x128x1xf32, #tpu.memory_space<vmem>>, %arg8: memref<4xf32, #tpu.memory_space<smem>>, %arg9: memref<1x8x1xf32, #tpu.memory_space<vmem>>, %arg10: memref<1x8x1xf32, #tpu.memory_space<vmem>>, %arg11: memref<1x1x1xf32, #tpu.memory_space<vmem>>, %arg12: memref<8x1xf32, #tpu.memory_space<vmem>>) attributes {dimension_semantics = [#tpu.dimension_semantics<parallel>, #tpu.dimension_semantics<arbitrary>], iteration_bounds = array<i64: 4, 1>, scalar_prefetch = 0 : i64, scratch_operands = 1 : i64, tpu.core_type = #tpu.core_type<tc>, window_params = [{pipeline_mode = #tpu.pipeline_mode<synchronous>, transform_indices = @transform_0, window_bounds = array<i64: 8, 128>}, {transform_indices = @transform_1, window_bounds = array<i64: 1, 8, 8>}, {transform_indices = @transform_2, window_bounds = array<i64: 1, 128, 128>}, {transform_indices = @transform_3, window_bounds = array<i64: 1, 8, 128>}, {transform_indices = @transform_4, window_bounds = array<i64: 1, 1, 128>}, {transform_indices = @transform_5, window_bounds = array<i64: 1, 128, 1>}, {transform_indices = @transform_6, window_bounds = array<i64: 4>}, {transform_indices = @transform_7, window_bounds = array<i64: 1, 8, 1>}, {transform_indices = @transform_8, window_bounds = array<i64: 1, 8, 1>}, {transform_indices = @transform_9, window_bounds = array<i64: 1, 1, 1>}]} {
    %c0_i32 = arith.constant 0 : i32
    %0 = arith.cmpi eq, %arg1, %c0_i32 : i32
    %1 = arith.extui %0 : i1 to i32
    %c0_i32_0 = arith.constant 0 : i32
    %2 = arith.cmpi ne, %1, %c0_i32_0 : i32
    scf.if %2 {
      %cst_26 = arith.constant 0.000000e+00 : f32
      %28 = vector.broadcast %cst_26 : f32 to vector<8x1xf32>
      %c0_27 = arith.constant 0 : index
      %c0_28 = arith.constant 0 : index
      %29 = vector.load %arg12[%c0_27, %c0_28] : memref<8x1xf32, #tpu.memory_space<vmem>>, vector<8x1xf32>
      tpu.vector_store %arg12[%c0_27, %c0_28], %28 {strides = array<i32>} : memref<8x1xf32, #tpu.memory_space<vmem>>, vector<8x1xf32>,
    } else {
    }
    %c0 = arith.constant 0 : index
    %c0_1 = arith.constant 0 : index
    %3 = vector.load %arg2[%c0, %c0_1] : memref<8x128xf32, #tpu.memory_space<vmem>>, vector<8x128xf32>
    %c0_2 = arith.constant 0 : index
    %c0_3 = arith.constant 0 : index
    %c0_4 = arith.constant 0 : index
    %4 = vector.load %arg4[%c0_2, %c0_3, %c0_4] : memref<1x128x128xf32, #tpu.memory_space<vmem>>, vector<1x128x128xf32>
    %5 = vector.shape_cast %4 : vector<1x128x128xf32> to vector<128x128xf32>
    %cst = arith.constant dense<0.000000e+00> : vector<8x128xf32>
    %6 = tpu.matmul %3, %5, %cst {dimension_numbers = #tpu.dot_dimension_numbers<[1], [0], [0], [1], [0, 0, 1, 1], [], []>} : vector<8x128xf32>, vector<128x128xf32>, vector<8x128xf32> -> vector<8x128xf32>
    %c0_5 = arith.constant 0 : index
    %c0_6 = arith.constant 0 : index
    %c0_7 = arith.constant 0 : index
    %7 = vector.load %arg3[%c0_5, %c0_6, %c0_7] : memref<1x8x8xf32, #tpu.memory_space<vmem>>, vector<1x8x8xf32>
    %8 = vector.shape_cast %7 : vector<1x8x8xf32> to vector<8x8xf32>
    %c0_8 = arith.constant 0 : index
    %c0_9 = arith.constant 0 : index
    %c0_10 = arith.constant 0 : index
    %9 = vector.load %arg5[%c0_8, %c0_9, %c0_10] : memref<1x8x128xf32, #tpu.memory_space<vmem>>, vector<1x8x128xf32>
    %10 = vector.shape_cast %9 : vector<1x8x128xf32> to vector<8x128xf32>
    %cst_11 = arith.constant dense<0.000000e+00> : vector<8x128xf32>
    %11 = tpu.matmul %8, %10, %cst_11 {dimension_numbers = #tpu.dot_dimension_numbers<[1], [0], [0], [1], [0, 0, 1, 1], [], []>} : vector<8x8xf32>, vector<8x128xf32>, vector<8x128xf32> -> vector<8x128xf32>
    %12 = arith.addf %6, %11 : vector<8x128xf32>
    %c0_12 = arith.constant 0 : index
    %c0_13 = arith.constant 0 : index
    %c0_14 = arith.constant 0 : index
    %13 = vector.load %arg6[%c0_12, %c0_13, %c0_14] : memref<1x1x128xf32, #tpu.memory_space<vmem>>, vector<1x1x128xf32>
    %14 = vector.shape_cast %13 : vector<1x1x128xf32> to vector<1x128xf32>
    %15 = vector.broadcast %14 : vector<1x128xf32> to vector<8x128xf32>
    %16 = arith.addf %12, %15 : vector<8x128xf32>
    %cst_15 = arith.constant 0.000000e+00 : f32
    %17 = vector.broadcast %cst_15 : f32 to vector<8x128xf32>
    %18 = arith.maximumf %16, %17 : vector<8x128xf32>
    %c0_16 = arith.constant 0 : index
    %c0_17 = arith.constant 0 : index
    %19 = vector.load %arg12[%c0_16, %c0_17] : memref<8x1xf32, #tpu.memory_space<vmem>>, vector<8x1xf32>
    %c0_18 = arith.constant 0 : index
    %c0_19 = arith.constant 0 : index
    %c0_20 = arith.constant 0 : index
    %20 = vector.load %arg7[%c0_18, %c0_19, %c0_20] : memref<1x128x1xf32, #tpu.memory_space<vmem>>, vector<1x128x1xf32>
    %21 = vector.shape_cast %20 : vector<1x128x1xf32> to vector<128x1xf32>
    %cst_21 = arith.constant dense<0.000000e+00> : vector<8x1xf32>
    %22 = tpu.matmul %18, %21, %cst_21 {dimension_numbers = #tpu.dot_dimension_numbers<[1], [0], [0], [1], [0, 0, 1, 1], [], []>} : vector<8x128xf32>, vector<128x1xf32>, vector<8x1xf32> -> vector<8x1xf32>
    %23 = arith.addf %19, %22 : vector<8x1xf32>
    %c0_22 = arith.constant 0 : index
    %c0_23 = arith.constant 0 : index
    %24 = vector.load %arg12[%c0_22, %c0_23] : memref<8x1xf32, #tpu.memory_space<vmem>>, vector<8x1xf32>
    tpu.vector_store %arg12[%c0_22, %c0_23], %23 {strides = array<i32>} : memref<8x1xf32, #tpu.memory_space<vmem>>, vector<8x1xf32>,
    %c0_i32_24 = arith.constant 0 : i32
    %25 = arith.cmpi eq, %arg1, %c0_i32_24 : i32
    %26 = arith.extui %25 : i1 to i32
    %c0_i32_25 = arith.constant 0 : i32
    %27 = arith.cmpi ne, %26, %c0_i32_25 : i32
    scf.if %27 {
      %c0_26 = arith.constant 0 : index
      %c0_27 = arith.constant 0 : index
      %28 = vector.load %arg12[%c0_26, %c0_27] : memref<8x1xf32, #tpu.memory_space<vmem>>, vector<8x1xf32>
      %29 = arith.index_cast %arg0 : i32 to index
      %30 = memref.load %arg8[%29] : memref<4xf32, #tpu.memory_space<smem>>
      %31 = vector.broadcast %30 : f32 to vector<8x1xf32>
      %32 = arith.addf %28, %31 : vector<8x1xf32>
      %c0_28 = arith.constant 0 : index
      %c0_29 = arith.constant 0 : index
      %c0_30 = arith.constant 0 : index
      %33 = vector.load %arg10[%c0_28, %c0_29, %c0_30] : memref<1x8x1xf32, #tpu.memory_space<vmem>>, vector<1x8x1xf32>
      %34 = vector.shape_cast %33 : vector<1x8x1xf32> to vector<8x1xf32>
      %35 = vector.shape_cast %32 : vector<8x1xf32> to vector<1x8x1xf32>
      tpu.vector_store %arg10[%c0_28, %c0_29, %c0_30], %35 {strides = array<i32>} : memref<1x8x1xf32, #tpu.memory_space<vmem>>, vector<1x8x1xf32>,
      %c0_31 = arith.constant 0 : index
      %c0_32 = arith.constant 0 : index
      %c0_33 = arith.constant 0 : index
      %36 = vector.load %arg9[%c0_31, %c0_32, %c0_33] : memref<1x8x1xf32, #tpu.memory_space<vmem>>, vector<1x8x1xf32>
      %37 = vector.shape_cast %36 : vector<1x8x1xf32> to vector<8x1xf32>
      %38 = arith.subf %32, %37 : vector<8x1xf32>
      %39 = tpu.iota {dimensions = array<i32: 0>} : vector<8x1xi32>
      %c2_i32 = arith.constant 2 : i32
      %40 = vector.broadcast %c2_i32 : i32 to vector<8x1xi32>
      %41 = arith.cmpi slt, %39, %40 : vector<8x1xi32>
      %cst_34 = arith.constant 0.000000e+00 : f32
      %42 = vector.broadcast %cst_34 : f32 to vector<8x1xf32>
      %43 = arith.select %41, %38, %42 : vector<8x1xi1>, vector<8x1xf32>
      %44 = arith.mulf %43, %43 : vector<8x1xf32>
      %45 = vector.shape_cast %44 : vector<8x1xf32> to vector<1x8x1xf32>
      %cst_35 = arith.constant dense<0.000000e+00> : vector<1xf32>
      %46 = vector.multi_reduction <add>, %45, %cst_35 [1, 2] : vector<1x8x1xf32> to vector<1xf32>
      %47 = vector.shape_cast %46 : vector<1xf32> to vector<1x1x1xf32>
      %48 = vector.extract %47[0, 0, 0] : f32 from vector<1x1x1xf32>
      %49 = vector.broadcast %48 : f32 to vector<1x1xf32>
      %c0_36 = arith.constant 0 : index
      %c0_37 = arith.constant 0 : index
      %c0_38 = arith.constant 0 : index
      %50 = vector.load %arg11[%c0_36, %c0_37, %c0_38] : memref<1x1x1xf32, #tpu.memory_space<vmem>>, vector<1x1x1xf32>
      %51 = vector.shape_cast %50 : vector<1x1x1xf32> to vector<1x1xf32>
      %52 = vector.shape_cast %49 : vector<1x1xf32> to vector<1x1x1xf32>
      tpu.vector_store %arg11[%c0_36, %c0_37, %c0_38], %52 {strides = array<i32>} : memref<1x1x1xf32, #tpu.memory_space<vmem>>, vector<1x1x1xf32>,
    } else {
    }
    return
  }
  func.func @transform_0(%arg0: i32, %arg1: i32) -> (i32, i32) {
    %c0_i32 = arith.constant 0 : i32
    %c0_i32_0 = arith.constant 0 : i32
    %c0_i32_1 = arith.constant 0 : i32
    return %c0_i32, %c0_i32_0 : i32, i32
  }
  func.func @transform_1(%arg0: i32, %arg1: i32) -> (i32, i32, i32) {
    %c0_i32 = arith.constant 0 : i32
    %c0_i32_0 = arith.constant 0 : i32
    %c0_i32_1 = arith.constant 0 : i32
    return %arg0, %c0_i32, %c0_i32_0 : i32, i32, i32
  }
  func.func @transform_2(%arg0: i32, %arg1: i32) -> (i32, i32, i32) {
    %c0_i32 = arith.constant 0 : i32
    %c0_i32_0 = arith.constant 0 : i32
    return %arg0, %c0_i32, %arg1 : i32, i32, i32
  }
  func.func @transform_3(%arg0: i32, %arg1: i32) -> (i32, i32, i32) {
    %c0_i32 = arith.constant 0 : i32
    %c0_i32_0 = arith.constant 0 : i32
    return %arg0, %c0_i32, %arg1 : i32, i32, i32
  }
  func.func @transform_4(%arg0: i32, %arg1: i32) -> (i32, i32, i32) {
    %c0_i32 = arith.constant 0 : i32
    %c0_i32_0 = arith.constant 0 : i32
    return %arg0, %c0_i32, %arg1 : i32, i32, i32
  }
  func.func @transform_5(%arg0: i32, %arg1: i32) -> (i32, i32, i32) {
    %c0_i32 = arith.constant 0 : i32
    %c0_i32_0 = arith.constant 0 : i32
    return %arg0, %arg1, %c0_i32 : i32, i32, i32
  }
  func.func @transform_6(%arg0: i32, %arg1: i32) -> i32 {
    %c0_i32 = arith.constant 0 : i32
    %c0_i32_0 = arith.constant 0 : i32
    return %c0_i32 : i32
  }
  func.func @transform_7(%arg0: i32, %arg1: i32) -> (i32, i32, i32) {
    %c0_i32 = arith.constant 0 : i32
    %c0_i32_0 = arith.constant 0 : i32
    %c0_i32_1 = arith.constant 0 : i32
    return %arg0, %c0_i32, %c0_i32_0 : i32, i32, i32
  }
  func.func @transform_8(%arg0: i32, %arg1: i32) -> (i32, i32, i32) {
    %c0_i32 = arith.constant 0 : i32
    %c0_i32_0 = arith.constant 0 : i32
    %c0_i32_1 = arith.constant 0 : i32
    return %arg0, %c0_i32, %c0_i32_0 : i32, i32, i32
  }
  func.func @transform_9(%arg0: i32, %arg1: i32) -> (i32, i32, i32) {
    %c0_i32 = arith.constant 0 : i32
    %c0_i32_0 = arith.constant 0 : i32
    %c0_i32_1 = arith.constant 0 : i32
    return %arg0, %c0_i32, %c0_i32_0 : i32, i32, i32
  }
}

</mosaic_0001>

<llo_original>
// kernel: tpu_custom_call.1
$region0: #{tpu_custom_call.1}
  #allocation0 [shape = 'u32[]', space=smem, size = 0x4, offset = 0x4, fixed_abs, tag = 'smem constant byte address 0x4 - core index']
  #allocation1 [shape = 'u32[144,128]{1,0:T(1,128)}', space=vmem, size = 0x12000, scoped, tag = 'internal scratch']
  #allocation2 [shape = 'f32[8,1]{1,0:T(8,128)}', space=vmem, size = 0x1000, scoped, tag = 'scratch operand']
  %s0 = inlined_call_operand.vmem [shape: f32[8,128], index: 0, kind: input, shape index: {}]
  %s1 = inlined_call_operand.vmem [shape: f32[4,8,8], index: 1, kind: input, shape index: {}]
  %s2 = inlined_call_operand.vmem [shape: f32[4,128,128], index: 2, kind: input, shape index: {}]
  %s3 = inlined_call_operand.hbm [shape: f32[4,8,128], index: 3, kind: input, shape index: {}]
  %s4 = inlined_call_operand.vmem [shape: f32[4,1,128], index: 4, kind: input, shape index: {}]
  %s5 = inlined_call_operand.vmem [shape: f32[4,128,1], index: 5, kind: input, shape index: {}]
  %s6 = inlined_call_operand.vmem [shape: f32[4], index: 6, kind: input, shape index: {}]
  %s7 = inlined_call_operand.vmem [shape: f32[4,8,1], index: 7, kind: input, shape index: {}]
  %s8 = inlined_call_operand.vmem [shape: f32[4,8,1], index: 8, kind: output, shape index: {0}]
  %s9 = inlined_call_operand.vmem [shape: f32[4,1,1], index: 9, kind: output, shape index: {1}]
  %10 = xla_tuple %s8, %s9
  %s11 = sld [smem:[#allocation0]]
  $region89: #{tpu_custom_call.1} parent=0
    _
  %s13 = ssub.s32 1, %s11
  %s14 = scalar_select 0, %s13, %s11
  $region1: #{tpu_custom_call.1} parent=0
    #allocation3 [shape = 'u8[8192]{0}', space=vmem, size = 0x2000, scoped, tag = 'input window, operand 3']
    #allocation4 [shape = 's32[2]{0}', space=sflag, size = 0x8, scoped, tag = 'scoped memory for tpu_custom_call.1']
    #allocation5 [shape = 's32[2]{0}', space=sflag, size = 0x8, scoped, tag = 'scoped memory for tpu_custom_call.1']
    #allocation6 [shape = 'u8[512]{0}', space=smem, size = 0x200, scoped, tag = 'input window, operand 6, single buffered']
    %15 = vsyncpa [#allocation4], 0
    %s16 = scalar_lea.sflag [#allocation4], 1
    %17 = vsyncpa %s16, 0
    %18 = vsyncpa [#allocation5], 0
    loop: start=0, step=1, limit=6
    $region2: #{tpu_custom_call.1} parent=1 // loop_pre_header
      _
    $region3: #{tpu_custom_call.1} parent=1 // loop_header
      %s20 = sphi 0, %s24
      %p21 = scmp.ge.s32.totalorder %s20, 6
      %s27 = sphi 0, %s39
      %s28 = sphi 0, %s35
      %s29 = sphi 0, %s27
      %s30 = sphi 0, %s28
      %s31 = sphi 0, %s29
      %s32 = sphi 0, %s30
      %s40 = sphi 0, %s40
      %s42 = sphi 0, %s40
      %s43 = sphi 0, %s42
      %s57 = sphi 0, %s43
      %s63 = sphi 0, %s65
      %s66 = sphi 0, %s63
      %s67 = sphi 0, %s66
      %s83 = sphi 0, %s67
      %s91 = sphi 0, %s93
      %s94 = sphi 0, %s91
      %s95 = sphi 0, %s94
      %s111 = sphi 0, %s95
      %s119 = sphi 0, %s121
      %s122 = sphi 0, %s119
      %s123 = sphi 0, %s122
      %s139 = sphi 0, %s123
      %s147 = sphi 0, %s149
      %s150 = sphi 0, %s147
      %s151 = sphi 0, %s150
      %s167 = sphi 0, %s151
      %s175 = sphi 0, %s177
      %s178 = sphi 0, %s175
      %s179 = sphi 0, %s178
      %s195 = sphi 0, %s179
      %s199 = sphi 0, %s199
      %s201 = sphi 0, %s199
      %s202 = sphi 0, %s201
      %s216 = sphi 0, %s202
      %s222 = sphi 0, %s224
      %s225 = sphi 0, %s222
      %s226 = sphi 0, %s225
      %s242 = sphi 0, %s226
      %s248 = sphi 0, %s250
      %s251 = sphi 0, %s248
      %s252 = sphi 0, %s251
      %s268 = sphi 0, %s252
      %s274 = sphi 0, %s276
      %s277 = sphi 0, %s274
      %s278 = sphi 0, %s277
      %s294 = sphi 0, %s278
    $region4: #{tpu_custom_call.1} parent=1 // loop_header_branch
      %23 = sbr.rel (%p21) target = $region8
    $region5: #{tpu_custom_call.1} parent=1 // loop_body
      %s25 = ssub.s32 %s20, 1
      %s26 = ssub.s32 %s20, 2
      %s33 = sadd.s32 1, %s28
      %p34 = scmp.ge.s32.totalorder %s33, 1
      %s35 = scalar_select %p34, 0, %s33
      %s36 = sadd.s32 1, %s27
      %s37 = scalar_select %p34, %s36, %s27
      %p38 = scmp.ge.s32.totalorder %s37, 4
      %s39 = scalar_select %p38, 0, %s37
      %s41 = sadd.s32 %s40, 1
      %p44 = scmp.eq.s32.totalorder %s20, 3
      %p45 = scmp.ne.s32.totalorder %s40, %s42
      %p46 = scmp.eq.s32.totalorder %s20, 0
      %p47 = por %p45, %p46
      %p48 = scmp.ne.s32.totalorder %s40, %s42
      %p49 = scmp.eq.s32.totalorder %s25, 3
      %p50 = por %p48, %p49
      %p51 = scmp.ne.s32.totalorder %s42, %s43
      %p52 = scmp.eq.s32.totalorder %s25, 0
      %p53 = por %p51, %p52
      %p54 = scmp.ne.s32.totalorder %s42, %s43
      %p55 = scmp.eq.s32.totalorder %s26, 3
      %p56 = por %p54, %p55
      %p58 = scmp.ne.s32.totalorder %s43, %s57
      %p59 = scmp.eq.s32.totalorder %s26, 0
      %p60 = por %p58, %p59
      %s61 = ssub.s32 %s27, %s39
      %p62 = scmp.eq.s32.totalorder %s61, 0
      %s64 = sadd.s32 %s63, 1
      %s65 = scalar_select %p62, %s63, %s64
      %p68 = pneg %p62
      %p69 = scmp.eq.s32.totalorder %s20, 3
      %p70 = por %p68, %p69
      %p71 = scmp.ne.s32.totalorder %s63, %s66
      %p72 = scmp.eq.s32.totalorder %s20, 0
      %p73 = por %p71, %p72
      %p74 = scmp.ne.s32.totalorder %s63, %s66
      %p75 = scmp.eq.s32.totalorder %s25, 3
      %p76 = por %p74, %p75
      %p77 = scmp.ne.s32.totalorder %s66, %s67
      %p78 = scmp.eq.s32.totalorder %s25, 0
      %p79 = por %p77, %p78
      %p80 = scmp.ne.s32.totalorder %s66, %s67
      %p81 = scmp.eq.s32.totalorder %s26, 3
      %p82 = por %p80, %p81
      %p84 = scmp.ne.s32.totalorder %s67, %s83
      %p85 = scmp.eq.s32.totalorder %s26, 0
      %p86 = por %p84, %p85
      %s87 = ssub.s32 %s27, %s39
      %s88 = ssub.s32 %s28, %s35
      %s89 = sor.u32 %s87, %s88
      %p90 = scmp.eq.s32.totalorder %s89, 0
      %s92 = sadd.s32 %s91, 1
      %s93 = scalar_select %p90, %s91, %s92
      %p96 = pneg %p90
      %p97 = scmp.eq.s32.totalorder %s20, 3
      %p98 = por %p96, %p97
      %p99 = scmp.ne.s32.totalorder %s91, %s94
      %p100 = scmp.eq.s32.totalorder %s20, 0
      %p101 = por %p99, %p100
      %p102 = scmp.ne.s32.totalorder %s91, %s94
      %p103 = scmp.eq.s32.totalorder %s25, 3
      %p104 = por %p102, %p103
      %p105 = scmp.ne.s32.totalorder %s94, %s95
      %p106 = scmp.eq.s32.totalorder %s25, 0
      %p107 = por %p105, %p106
      %p108 = scmp.ne.s32.totalorder %s94, %s95
      %p109 = scmp.eq.s32.totalorder %s26, 3
      %p110 = por %p108, %p109
      %p112 = scmp.ne.s32.totalorder %s95, %s111
      %p113 = scmp.eq.s32.totalorder %s26, 0
      %p114 = por %p112, %p113
      %s115 = ssub.s32 %s27, %s39
      %s116 = ssub.s32 %s28, %s35
      %s117 = sor.u32 %s115, %s116
      %p118 = scmp.eq.s32.totalorder %s117, 0
      %s120 = sadd.s32 %s119, 1
      %s121 = scalar_select %p118, %s119, %s120
      %p124 = pneg %p118
      %p125 = scmp.eq.s32.totalorder %s20, 3
      %p126 = por %p124, %p125
      %p127 = scmp.ne.s32.totalorder %s119, %s122
      %p128 = scmp.eq.s32.totalorder %s20, 0
      %p129 = por %p127, %p128
      %p130 = scmp.ne.s32.totalorder %s119, %s122
      %p131 = scmp.eq.s32.totalorder %s25, 3
      %p132 = por %p130, %p131
      %p133 = scmp.ne.s32.totalorder %s122, %s123
      %p134 = scmp.eq.s32.totalorder %s25, 0
      %p135 = por %p133, %p134
      %p136 = scmp.ne.s32.totalorder %s122, %s123
      %p137 = scmp.eq.s32.totalorder %s26, 3
      %p138 = por %p136, %p137
      %p140 = scmp.ne.s32.totalorder %s123, %s139
      %p141 = scmp.eq.s32.totalorder %s26, 0
      %p142 = por %p140, %p141
      %s143 = ssub.s32 %s27, %s39
      %s144 = ssub.s32 %s28, %s35
      %s145 = sor.u32 %s143, %s144
      %p146 = scmp.eq.s32.totalorder %s145, 0
      %s148 = sadd.s32 %s147, 1
      %s149 = scalar_select %p146, %s147, %s148
      %p152 = pneg %p146
      %p153 = scmp.eq.s32.totalorder %s20, 3
      %p154 = por %p152, %p153
      %p155 = scmp.ne.s32.totalorder %s147, %s150
      %p156 = scmp.eq.s32.totalorder %s20, 0
      %p157 = por %p155, %p156
      %p158 = scmp.ne.s32.totalorder %s147, %s150
      %p159 = scmp.eq.s32.totalorder %s25, 3
      %p160 = por %p158, %p159
      %p161 = scmp.ne.s32.totalorder %s150, %s151
      %p162 = scmp.eq.s32.totalorder %s25, 0
      %p163 = por %p161, %p162
      %p164 = scmp.ne.s32.totalorder %s150, %s151
      %p165 = scmp.eq.s32.totalorder %s26, 3
      %p166 = por %p164, %p165
      %p168 = scmp.ne.s32.totalorder %s151, %s167
      %p169 = scmp.eq.s32.totalorder %s26, 0
      %p170 = por %p168, %p169
      %s171 = ssub.s32 %s27, %s39
      %s172 = ssub.s32 %s28, %s35
      %s173 = sor.u32 %s171, %s172
      %p174 = scmp.eq.s32.totalorder %s173, 0
      %s176 = sadd.s32 %s175, 1
      %s177 = scalar_select %p174, %s175, %s176
      %p180 = pneg %p174
      %p181 = scmp.eq.s32.totalorder %s20, 3
      %p182 = por %p180, %p181
      %p183 = scmp.ne.s32.totalorder %s175, %s178
      %p184 = scmp.eq.s32.totalorder %s20, 0
      %p185 = por %p183, %p184
      %p186 = scmp.ne.s32.totalorder %s175, %s178
      %p187 = scmp.eq.s32.totalorder %s25, 3
      %p188 = por %p186, %p187
      %p189 = scmp.ne.s32.totalorder %s178, %s179
      %p190 = scmp.eq.s32.totalorder %s25, 0
      %p191 = por %p189, %p190
      %p192 = scmp.ne.s32.totalorder %s178, %s179
      %p193 = scmp.eq.s32.totalorder %s26, 3
      %p194 = por %p192, %p193
      %p196 = scmp.ne.s32.totalorder %s179, %s195
      %p197 = scmp.eq.s32.totalorder %s26, 0
      %p198 = por %p196, %p197
      %s200 = sadd.s32 %s199, 1
      %p203 = scmp.eq.s32.totalorder %s20, 3
      %p204 = scmp.ne.s32.totalorder %s199, %s201
      %p205 = scmp.eq.s32.totalorder %s20, 0
      %p206 = por %p204, %p205
      %p207 = scmp.ne.s32.totalorder %s199, %s201
      %p208 = scmp.eq.s32.totalorder %s25, 3
      %p209 = por %p207, %p208
      %p210 = scmp.ne.s32.totalorder %s201, %s202
      %p211 = scmp.eq.s32.totalorder %s25, 0
      %p212 = por %p210, %p211
      %p213 = scmp.ne.s32.totalorder %s201, %s202
      %p214 = scmp.eq.s32.totalorder %s26, 3
      %p215 = por %p213, %p214
      %p217 = scmp.ne.s32.totalorder %s202, %s216
      %p218 = scmp.eq.s32.totalorder %s26, 0
      %p219 = por %p217, %p218
      %s220 = ssub.s32 %s27, %s39
      %p221 = scmp.eq.s32.totalorder %s220, 0
      %s223 = sadd.s32 %s222, 1
      %s224 = scalar_select %p221, %s222, %s223
      %p227 = pneg %p221
      %p228 = scmp.eq.s32.totalorder %s20, 3
      %p229 = por %p227, %p228
      %p230 = scmp.ne.s32.totalorder %s222, %s225
      %p231 = scmp.eq.s32.totalorder %s20, 0
      %p232 = por %p230, %p231
      %p233 = scmp.ne.s32.totalorder %s222, %s225
      %p234 = scmp.eq.s32.totalorder %s25, 3
      %p235 = por %p233, %p234
      %p236 = scmp.ne.s32.totalorder %s225, %s226
      %p237 = scmp.eq.s32.totalorder %s25, 0
      %p238 = por %p236, %p237
      %p239 = scmp.ne.s32.totalorder %s225, %s226
      %p240 = scmp.eq.s32.totalorder %s26, 3
      %p241 = por %p239, %p240
      %p243 = scmp.ne.s32.totalorder %s226, %s242
      %p244 = scmp.eq.s32.totalorder %s26, 0
      %p245 = por %p243, %p244
      %s246 = ssub.s32 %s27, %s39
      %p247 = scmp.eq.s32.totalorder %s246, 0
      %s249 = sadd.s32 %s248, 1
      %s250 = scalar_select %p247, %s248, %s249
      %p253 = pneg %p247
      %p254 = scmp.eq.s32.totalorder %s20, 3
      %p255 = por %p253, %p254
      %p256 = scmp.ne.s32.totalorder %s248, %s251
      %p257 = scmp.eq.s32.totalorder %s20, 0
      %p258 = por %p256, %p257
      %p259 = scmp.ne.s32.totalorder %s248, %s251
      %p260 = scmp.eq.s32.totalorder %s25, 3
      %p261 = por %p259, %p260
      %p262 = scmp.ne.s32.totalorder %s251, %s252
      %p263 = scmp.eq.s32.totalorder %s25, 0
      %p264 = por %p262, %p263
      %p265 = scmp.ne.s32.totalorder %s251, %s252
      %p266 = scmp.eq.s32.totalorder %s26, 3
      %p267 = por %p265, %p266
      %p269 = scmp.ne.s32.totalorder %s252, %s268
      %p270 = scmp.eq.s32.totalorder %s26, 0
      %p271 = por %p269, %p270
      %s272 = ssub.s32 %s27, %s39
      %p273 = scmp.eq.s32.totalorder %s272, 0
      %s275 = sadd.s32 %s274, 1
      %s276 = scalar_select %p273, %s274, %s275
      %p279 = pneg %p273
      %p280 = scmp.eq.s32.totalorder %s20, 3
      %p281 = por %p279, %p280
      %p282 = scmp.ne.s32.totalorder %s274, %s277
      %p283 = scmp.eq.s32.totalorder %s20, 0
      %p284 = por %p282, %p283
      %p285 = scmp.ne.s32.totalorder %s274, %s277
      %p286 = scmp.eq.s32.totalorder %s25, 3
      %p287 = por %p285, %p286
      %p288 = scmp.ne.s32.totalorder %s277, %s278
      %p289 = scmp.eq.s32.totalorder %s25, 0
      %p290 = por %p288, %p289
      %p291 = scmp.ne.s32.totalorder %s277, %s278
      %p292 = scmp.eq.s32.totalorder %s26, 3
      %p293 = por %p291, %p292
      %p295 = scmp.ne.s32.totalorder %s278, %s294
      %p296 = scmp.eq.s32.totalorder %s26, 0
      %p297 = por %p295, %p296
      %p298 = scmp.le.s32.totalorder 1, %s20
      %p299 = scmp.lt.s32.totalorder %s20, 5
      %p300 = pnand %p298, %p299
      %p301 = pneg %p300
      // Predicated region
      $region9: #{tpu_custom_call.1} parent=5 // pred_check
        _
      $region10: #{tpu_custom_call.1} parent=5 // pred_check_branch
        %303 = sbr.rel (%p300) target = $region12
      $region11: #{tpu_custom_call.1} parent=5 // pred_region
        %s304 = ssub.s32 %s20, 1
        // Predicated region
        $region13: #{tpu_custom_call.1} parent=11 // pred_check
          %p305 = pneg %p53
        $region14: #{tpu_custom_call.1} parent=11 // pred_check_branch
          %307 = sbr.rel (%p305) target = $region16
        $region15: #{tpu_custom_call.1} parent=11 // pred_region
          _
        $region16: #{tpu_custom_call.1} parent=11 // pred_fallthru
          _
        // Predicated region
        $region17: #{tpu_custom_call.1} parent=11 // pred_check
          %p308 = pneg %p212
        $region18: #{tpu_custom_call.1} parent=11 // pred_check_branch
          %310 = sbr.rel (%p308) target = $region20
        $region19: #{tpu_custom_call.1} parent=11 // pred_region
          %s312 = ssub.s32 16, 16
          %313 = vsyncadd [#allocation5], %s312
          %s315 = sshll.u32 %s6, 4
          %s316 = int_to_ptr.vmem [resolvable:$true] %s315
          %318 = dma.vmem_to_smem %s316, 16, [#allocation6], [#allocation5]
        $region20: #{tpu_custom_call.1} parent=11 // pred_fallthru
          _
      $region12: #{tpu_custom_call.1} parent=5 // pred_fallthru
        _
      %p319 = scmp.lt.s32.totalorder %s20, 4
      // Predicated region
      $region21: #{tpu_custom_call.1} parent=5 // pred_check
        %p320 = pneg %p319
      $region22: #{tpu_custom_call.1} parent=5 // pred_check_branch
        %322 = sbr.rel (%p320) target = $region24
      $region23: #{tpu_custom_call.1} parent=5 // pred_region
        // Predicated region
        $region25: #{tpu_custom_call.1} parent=23 // pred_check
          %p323 = pneg %p73
        $region26: #{tpu_custom_call.1} parent=23 // pred_check_branch
          %325 = sbr.rel (%p323) target = $region28
        $region27: #{tpu_custom_call.1} parent=23 // pred_region
          %p326 = scmp.lt.s32.totalorder %s27, 3
          %s327 = scalar_select %p326, %s27, 3
          %s328 = smul.addr %s327, 8
          %s329 = scalar_lea.vmem %s1, %s328
        $region28: #{tpu_custom_call.1} parent=23 // pred_fallthru
          _
        // Predicated region
        $region29: #{tpu_custom_call.1} parent=23 // pred_check
          %p330 = pneg %p101
        $region30: #{tpu_custom_call.1} parent=23 // pred_check_branch
          %332 = sbr.rel (%p330) target = $region32
        $region31: #{tpu_custom_call.1} parent=23 // pred_region
          %p333 = scmp.lt.s32.totalorder %s27, 3
          %s334 = scalar_select %p333, %s27, 3
          %p335 = scmp.lt.s32.totalorder %s28, 0
          %s336 = scalar_select %p335, %s28, 0
          %s337 = smul.addr %s334, 16
          %s338 = sadd.s32 %s336, %s337
          %s339 = smul.addr %s338, 8
          %s340 = scalar_lea.vmem %s2, %s339
        $region32: #{tpu_custom_call.1} parent=23 // pred_fallthru
          _
        // Predicated region
        $region33: #{tpu_custom_call.1} parent=23 // pred_check
          %p341 = pneg %p129
        $region34: #{tpu_custom_call.1} parent=23 // pred_check_branch
          %343 = sbr.rel (%p341) target = $region36
        $region35: #{tpu_custom_call.1} parent=23 // pred_region
          %s344 = sand.u32 %s119, 1
          %s345 = scalar_lea.sflag [#allocation4], %s344
          %s346 = sand.u32 %s119, 1
          %s347 = smul.addr %s346, 8
          %s348 = scalar_lea.vmem [#allocation3], %s347
          %s350 = ssub.s32 128, 128
          %351 = vsyncadd %s345, %s350
          %s352 = sadd.s32 %s28, %s27
          %s353 = smul.addr %s352, 128
          %s354 = scalar_lea.hbm %s3, %s353
          %s356 = sshll.u32 %s348, 4
          %s357 = int_to_ptr.vmem [resolvable:$true] %s356
          %359 = dma.hbm_to_vmem [thread:$0]  %s354, 128, %s357, %s345
        $region36: #{tpu_custom_call.1} parent=23 // pred_fallthru
          _
        // Predicated region
        $region37: #{tpu_custom_call.1} parent=23 // pred_check
          %p360 = pneg %p157
        $region38: #{tpu_custom_call.1} parent=23 // pred_check_branch
          %362 = sbr.rel (%p360) target = $region40
        $region39: #{tpu_custom_call.1} parent=23 // pred_region
          %p363 = scmp.lt.s32.totalorder %s27, 3
          %s364 = scalar_select %p363, %s27, 3
          %p365 = scmp.lt.s32.totalorder %s28, 0
          %s366 = scalar_select %p365, %s28, 0
          %s367 = sadd.s32 %s366, %s364
          %s368 = scalar_lea.vmem %s4, %s367
        $region40: #{tpu_custom_call.1} parent=23 // pred_fallthru
          _
        // Predicated region
        $region41: #{tpu_custom_call.1} parent=23 // pred_check
          %p369 = pneg %p185
        $region42: #{tpu_custom_call.1} parent=23 // pred_check_branch
          %371 = sbr.rel (%p369) target = $region44
        $region43: #{tpu_custom_call.1} parent=23 // pred_region
          %s372 = smul.u32 16, %s28
          %p373 = scmp.lt.s32.totalorder %s27, 3
          %s374 = scalar_select %p373, %s27, 3
          %p375 = scmp.lt.s32.totalorder %s372, 15
          %s376 = scalar_select %p375, %s372, 15
          %s377 = smul.addr %s374, 16
          %s378 = sadd.s32 %s376, %s377
          %s379 = smul.addr %s378, 8
          %s380 = scalar_lea.vmem %s5, %s379
          %s381 = smul.u32 16, %s28
        $region44: #{tpu_custom_call.1} parent=23 // pred_fallthru
          _
        // Predicated region
        $region45: #{tpu_custom_call.1} parent=23 // pred_check
          %p382 = pneg %p232
        $region46: #{tpu_custom_call.1} parent=23 // pred_check_branch
          %384 = sbr.rel (%p382) target = $region48
        $region47: #{tpu_custom_call.1} parent=23 // pred_region
          %p385 = scmp.lt.s32.totalorder %s27, 3
          %s386 = scalar_select %p385, %s27, 3
          %s387 = smul.addr %s386, 8
          %s388 = scalar_lea.vmem %s7, %s387
        $region48: #{tpu_custom_call.1} parent=23 // pred_fallthru
          _
      $region24: #{tpu_custom_call.1} parent=5 // pred_fallthru
        _
      %p389 = scmp.le.s32.totalorder 1, %s20
      %p390 = scmp.lt.s32.totalorder %s20, 5
      %p391 = pnand %p389, %p390
      %p392 = pneg %p391
      // Predicated region
      $region49: #{tpu_custom_call.1} parent=5 // pred_check
        _
      $region50: #{tpu_custom_call.1} parent=5 // pred_check_branch
        %394 = sbr.rel (%p391) target = $region52
      $region51: #{tpu_custom_call.1} parent=5 // pred_region
        %s395 = ssub.s32 %s20, 1
        %s396 = sand.u32 %s122, 1
        %s397 = scalar_lea.sflag [#allocation4], %s396
        %s398 = sand.u32 %s122, 1
        %s399 = smul.addr %s398, 8
        %s400 = scalar_lea.vmem [#allocation3], %s399
        // Predicated region
        $region53: #{tpu_custom_call.1} parent=51 // pred_check
          %p401 = pneg %p135
        $region54: #{tpu_custom_call.1} parent=51 // pred_check_branch
          %403 = sbr.rel (%p401) target = $region56
        $region55: #{tpu_custom_call.1} parent=51 // pred_region
          %404 = dma.done %s397, 128
        $region56: #{tpu_custom_call.1} parent=51 // pred_fallthru
          _
        // Predicated region
        $region57: #{tpu_custom_call.1} parent=51 // pred_check
          %p405 = pneg %p212
        $region58: #{tpu_custom_call.1} parent=51 // pred_check_branch
          %407 = sbr.rel (%p405) target = $region60
        $region59: #{tpu_custom_call.1} parent=51 // pred_region
          %408 = dma.done [#allocation5], 16
        $region60: #{tpu_custom_call.1} parent=51 // pred_fallthru
          _
        %409 = sfence
        %p410 = pneg %p53
        %p411 = pneg %p50
        %p412 = scmp.lt.s32.totalorder %s29, 3
        %s413 = scalar_select %p412, %s29, 3
        %s414 = smul.addr %s413, 8
        %s415 = scalar_lea.vmem %s1, %s414
        %p416 = pneg %p79
        %p417 = pneg %p76
        %p418 = scmp.lt.s32.totalorder %s29, 3
        %s419 = scalar_select %p418, %s29, 3
        %p420 = scmp.lt.s32.totalorder %s30, 0
        %s421 = scalar_select %p420, %s30, 0
        %s422 = smul.addr %s419, 16
        %s423 = sadd.s32 %s421, %s422
        %s424 = smul.addr %s423, 8
        %s425 = scalar_lea.vmem %s2, %s424
        %p426 = pneg %p107
        %p427 = pneg %p104
        %s428 = sand.u32 %s122, 1
        %s429 = scalar_lea.sflag [#allocation4], %s428
        %s430 = sand.u32 %s122, 1
        %s431 = smul.addr %s430, 8
        %s432 = scalar_lea.vmem [#allocation3], %s431
        %p433 = pneg %p135
        %p434 = pneg %p132
        %p435 = scmp.lt.s32.totalorder %s29, 3
        %s436 = scalar_select %p435, %s29, 3
        %p437 = scmp.lt.s32.totalorder %s30, 0
        %s438 = scalar_select %p437, %s30, 0
        %s439 = sadd.s32 %s438, %s436
        %s440 = scalar_lea.vmem %s4, %s439
        %p441 = pneg %p163
        %p442 = pneg %p160
        %s443 = smul.u32 16, %s30
        %p444 = scmp.lt.s32.totalorder %s29, 3
        %s445 = scalar_select %p444, %s29, 3
        %p446 = scmp.lt.s32.totalorder %s443, 15
        %s447 = scalar_select %p446, %s443, 15
        %s448 = smul.addr %s445, 16
        %s449 = sadd.s32 %s447, %s448
        %s450 = smul.addr %s449, 8
        %s451 = scalar_lea.vmem %s5, %s450
        %p452 = pneg %p191
        %p453 = pneg %p188
        %p454 = pneg %p212
        %p455 = pneg %p209
        %p456 = scmp.lt.s32.totalorder %s29, 3
        %s457 = scalar_select %p456, %s29, 3
        %s458 = smul.addr %s457, 8
        %s459 = scalar_lea.vmem %s7, %s458
        %p460 = pneg %p238
        %p461 = pneg %p235
        %p462 = pneg %p264
        %p463 = pneg %p261
        %p464 = scmp.lt.s32.totalorder %s29, 3
        %s465 = scalar_select %p464, %s29, 3
        %s466 = smul.addr %s465, 8
        %s467 = scalar_lea.vmem %s8, %s466
        %p468 = pneg %p290
        %p469 = pneg %p287
        %p470 = scmp.lt.s32.totalorder %s29, 3
        %s471 = scalar_select %p470, %s29, 3
        %s472 = scalar_lea.vmem %s9, %s471
        %p473 = scmp.lt.s32.totalorder %s29, 3
        %s474 = scalar_select %p473, %s29, 3
        %s475 = smul.addr %s474, 8
        %s476 = scalar_lea.vmem %s1, %s475
        %p477 = scmp.lt.s32.totalorder %s29, 3
        %s478 = scalar_select %p477, %s29, 3
        %p479 = scmp.lt.s32.totalorder %s30, 0
        %s480 = scalar_select %p479, %s30, 0
        %s481 = smul.addr %s478, 16
        %s482 = sadd.s32 %s480, %s481
        %s483 = smul.addr %s482, 8
        %s484 = scalar_lea.vmem %s2, %s483
        %p485 = scmp.lt.s32.totalorder %s29, 3
        %s486 = scalar_select %p485, %s29, 3
        %p487 = scmp.lt.s32.totalorder %s30, 0
        %s488 = scalar_select %p487, %s30, 0
        %s489 = sadd.s32 %s488, %s486
        %s490 = scalar_lea.vmem %s4, %s489
        %s491 = smul.u32 16, %s30
        %p492 = scmp.lt.s32.totalorder %s29, 3
        %s493 = scalar_select %p492, %s29, 3
        %p494 = scmp.lt.s32.totalorder %s491, 15
        %s495 = scalar_select %p494, %s491, 15
        %s496 = smul.addr %s493, 16
        %s497 = sadd.s32 %s495, %s496
        %s498 = smul.addr %s497, 8
        %s499 = scalar_lea.vmem %s5, %s498
        %s500 = smul.u32 16, %s30
        %p501 = scmp.lt.s32.totalorder %s29, 3
        %s502 = scalar_select %p501, %s29, 3
        %s503 = smul.addr %s502, 8
        %s504 = scalar_lea.vmem %s7, %s503
        %p505 = scmp.lt.s32.totalorder %s29, 3
        %s506 = scalar_select %p505, %s29, 3
        %s507 = smul.addr %s506, 8
        %s508 = scalar_lea.vmem %s8, %s507
        %p509 = scmp.lt.s32.totalorder %s29, 3
        %s510 = scalar_select %p509, %s29, 3
        %s511 = scalar_lea.vmem %s9, %s510
        %p512 = scmp.eq.s32.totalorder %s30, 0
        // Predicated region
        $region61: #{tpu_custom_call.1} parent=51 // pred_check
          %p513 = pneg %p512
        $region62: #{tpu_custom_call.1} parent=51 // pred_check_branch
          %515 = sbr.rel (%p513) target = $region64
        $region63: #{tpu_custom_call.1} parent=51 // pred_region
          %vm516 = vcmask 7168
          %517 = vst.msk [vmem:[#allocation2] sm:$0xff] %vm516, 0.0
        $region64: #{tpu_custom_call.1} parent=51 // pred_fallthru
          _
        %v518 = vld [vmem:[%s0] sm:$0xff]
        %v519 = vld [vmem:[%s484] sm:$0xff]
        %v520 = vld [vmem:[%s484 + $0x8] sm:$0xff]
        %v521 = vld [vmem:[%s484 + $0x10] sm:$0xff]
        %v522 = vld [vmem:[%s484 + $0x18] sm:$0xff]
        %v523 = vld [vmem:[%s484 + $0x20] sm:$0xff]
        %v524 = vld [vmem:[%s484 + $0x28] sm:$0xff]
        %v525 = vld [vmem:[%s484 + $0x30] sm:$0xff]
        %v526 = vld [vmem:[%s484 + $0x38] sm:$0xff]
        %v527 = vld [vmem:[%s484 + $0x40] sm:$0xff]
        %v528 = vld [vmem:[%s484 + $0x48] sm:$0xff]
        %v529 = vld [vmem:[%s484 + $0x50] sm:$0xff]
        %v530 = vld [vmem:[%s484 + $0x58] sm:$0xff]
        %v531 = vld [vmem:[%s484 + $0x60] sm:$0xff]
        %v532 = vld [vmem:[%s484 + $0x68] sm:$0xff]
        %v533 = vld [vmem:[%s484 + $0x70] sm:$0xff]
        %v534 = vld [vmem:[%s484 + $0x78] sm:$0xff]
        %v535 = vld [vmem:[%s476] sm:$0xff]
        %v536 = vld [vmem:[%s400] sm:$0xff]
        %vm537 = vcmask 64512
        %v539 = vsel %vm537, %v535, 0
        %541 = vmatprep.subr.mxu0 0.0
        %542 = vmatpush1.msra.mxu0 %v536
        %543 = vmatprep.subr.mxu0 0.0
        %544 = vmatpush1.msra.mxu0 0.0
        %545 = vmatprep.subr.mxu0 0.0
        %546 = vmatpush1.msra.mxu0 0.0
        %547 = vmatprep.subr.mxu0 0.0
        %548 = vmatpush1.msra.mxu0 0.0
        %549 = vmatprep.subr.mxu0 0.0
        %550 = vmatpush1.msra.mxu0 0.0
        %551 = vmatprep.subr.mxu0 0.0
        %552 = vmatpush1.msra.mxu0 0.0
        %553 = vmatprep.subr.mxu0 0.0
        %554 = vmatpush1.msra.mxu0 0.0
        %555 = vmatprep.subr.mxu0 0.0
        %556 = vmatpush1.msra.mxu0 0.0
        %557 = vmatprep.subr.mxu0 0.0
        %558 = vmatpush1.msra.mxu0 0.0
        %559 = vmatprep.subr.mxu0 0.0
        %560 = vmatpush1.msra.mxu0 0.0
        %561 = vmatprep.subr.mxu0 0.0
        %562 = vmatpush1.msra.mxu0 0.0
        %563 = vmatprep.subr.mxu0 0.0
        %564 = vmatpush1.msra.mxu0 0.0
        %565 = vmatprep.subr.mxu0 0.0
        %566 = vmatpush1.msra.mxu0 0.0
        %567 = vmatprep.subr.mxu0 0.0
        %568 = vmatpush1.msra.mxu0 0.0
        %569 = vmatprep.subr.mxu0 0.0
        %570 = vmatpush1.msra.mxu0 0.0
        %571 = vmatprep.subr.mxu0 0.0
        %572 = vmatpush1.msra.mxu0 0.0
        %573 = vmatprep.subr.mxu0 0.0
        %574 = vmatpush1.msra.mxu0 0.0
        %575 = vmatprep.subr.mxu0 0.0
        %576 = vmatpush1.msra.mxu0 0.0
        %577 = vmatprep.subr.mxu0 0.0
        %578 = vmatpush1.msra.mxu0 0.0
        %579 = vmatprep.subr.mxu0 0.0
        %580 = vmatpush1.msra.mxu0 0.0
        %581 = vmatprep.subr.mxu0 0.0
        %582 = vmatpush1.msra.mxu0 0.0
        %583 = vmatprep.subr.mxu0 0.0
        %584 = vmatpush1.msra.mxu0 0.0
        %585 = vmatprep.subr.mxu0 0.0
        %586 = vmatpush1.msra.mxu0 0.0
        %587 = vmatprep.subr.mxu0 0.0
        %588 = vmatpush1.msra.mxu0 0.0
        %589 = vmatprep.subr.mxu0 0.0
        %590 = vmatpush1.msra.mxu0 0.0
        %591 = vmatprep.subr.mxu0 0.0
        %592 = vmatpush1.msra.mxu0 0.0
        %593 = vmatprep.subr.mxu0 0.0
        %594 = vmatpush1.msra.mxu0 0.0
        %595 = vmatprep.subr.mxu0 0.0
        %596 = vmatpush1.msra.mxu0 0.0
        %597 = vmatprep.subr.mxu0 0.0
        %598 = vmatpush1.msra.mxu0 0.0
        %599 = vmatprep.subr.mxu0 0.0
        %600 = vmatpush1.msra.mxu0 0.0
        %601 = vmatprep.subr.mxu0 0.0
        %602 = vmatpush1.msra.mxu0 0.0
        %603 = vmatprep.subr.mxu0 0.0
        %604 = vmatpush1.msra.mxu0 0.0
        %605 = vmatprep.mubr.f32.mxu0 0.0
        %606 = vmatmul.mubr.f32.gmra.mrb[0].mxu0 %v539
        %v607 = vpop.f32.mrb[0].mxu0
        %v608 = vadd.f32 0.0, %v607
        %v609 = vpop.f32.mrb[0].mxu0
        %610 = vdwg.mxu0
        %611 = vmatprep.subr.mxu0 0.0
        %612 = vmatpush1.msra.mxu0 %v519
        %613 = vmatprep.subr.mxu0 0.0
        %614 = vmatpush1.msra.mxu0 %v520
        %615 = vmatprep.subr.mxu0 0.0
        %616 = vmatpush1.msra.mxu0 %v521
        %617 = vmatprep.subr.mxu0 0.0
        %618 = vmatpush1.msra.mxu0 %v522
        %619 = vmatprep.subr.mxu0 0.0
        %620 = vmatpush1.msra.mxu0 %v523
        %621 = vmatprep.subr.mxu0 0.0
        %622 = vmatpush1.msra.mxu0 %v524
        %623 = vmatprep.subr.mxu0 0.0
        %624 = vmatpush1.msra.mxu0 %v525
        %625 = vmatprep.subr.mxu0 0.0
        %626 = vmatpush1.msra.mxu0 %v526
        %627 = vmatprep.subr.mxu0 0.0
        %628 = vmatpush1.msra.mxu0 %v527
        %629 = vmatprep.subr.mxu0 0.0
        %630 = vmatpush1.msra.mxu0 %v528
        %631 = vmatprep.subr.mxu0 0.0
        %632 = vmatpush1.msra.mxu0 %v529
        %633 = vmatprep.subr.mxu0 0.0
        %634 = vmatpush1.msra.mxu0 %v530
        %635 = vmatprep.subr.mxu0 0.0
        %636 = vmatpush1.msra.mxu0 %v531
        %637 = vmatprep.subr.mxu0 0.0
        %638 = vmatpush1.msra.mxu0 %v532
        %639 = vmatprep.subr.mxu0 0.0
        %640 = vmatpush1.msra.mxu0 %v533
        %641 = vmatprep.subr.mxu0 0.0
        %642 = vmatpush1.msra.mxu0 %v534
        %643 = vmatprep.subr.mxu0 0.0
        %644 = vmatpush1.msra.mxu0 0.0
        %645 = vmatprep.subr.mxu0 0.0
        %646 = vmatpush1.msra.mxu0 0.0
        %647 = vmatprep.subr.mxu0 0.0
        %648 = vmatpush1.msra.mxu0 0.0
        %649 = vmatprep.subr.mxu0 0.0
        %650 = vmatpush1.msra.mxu0 0.0
        %651 = vmatprep.subr.mxu0 0.0
        %652 = vmatpush1.msra.mxu0 0.0
        %653 = vmatprep.subr.mxu0 0.0
        %654 = vmatpush1.msra.mxu0 0.0
        %655 = vmatprep.subr.mxu0 0.0
        %656 = vmatpush1.msra.mxu0 0.0
        %657 = vmatprep.subr.mxu0 0.0
        %658 = vmatpush1.msra.mxu0 0.0
        %659 = vmatprep.subr.mxu0 0.0
        %660 = vmatpush1.msra.mxu0 0.0
        %661 = vmatprep.subr.mxu0 0.0
        %662 = vmatpush1.msra.mxu0 0.0
        %663 = vmatprep.subr.mxu0 0.0
        %664 = vmatpush1.msra.mxu0 0.0
        %665 = vmatprep.subr.mxu0 0.0
        %666 = vmatpush1.msra.mxu0 0.0
        %667 = vmatprep.subr.mxu0 0.0
        %668 = vmatpush1.msra.mxu0 0.0
        %669 = vmatprep.subr.mxu0 0.0
        %670 = vmatpush1.msra.mxu0 0.0
        %671 = vmatprep.subr.mxu0 0.0
        %672 = vmatpush1.msra.mxu0 0.0
        %673 = vmatprep.subr.mxu0 0.0
        %674 = vmatpush1.msra.mxu0 0.0
        %675 = vmatprep.mubr.f32.mxu0 0.0
        %676 = vmatmul.mubr.f32.gmra.mrb[0].mxu0 %v518
        %v677 = vpop.f32.mrb[0].mxu0
        %v678 = vadd.f32 %v608, %v677
        %v679 = vpop.f32.mrb[0].mxu0
        %680 = vdwg.mxu0
        %v681 = vld [vmem:[%s490] sm:$0x1]
        %v683 = vlaneseq
        %v684 = vshrl.u32 %v683, 7
        %v685 = vsub.s32 0, %v684
        %v686 = vrot.slane %v681, %v685
        %v688 = vadd.f32 %v678, %v686
        %v689 = vmax.f32 %v688, 0.0
        %v690 = vld [vmem:[#allocation2] sm:$0xff]
        %v691 = vld [vmem:[%s499] sm:$0xff]
        %v692 = vld [vmem:[%s499 + $0x8] sm:$0xff]
        %v693 = vld [vmem:[%s499 + $0x10] sm:$0xff]
        %v694 = vld [vmem:[%s499 + $0x18] sm:$0xff]
        %v695 = vld [vmem:[%s499 + $0x20] sm:$0xff]
        %v696 = vld [vmem:[%s499 + $0x28] sm:$0xff]
        %v697 = vld [vmem:[%s499 + $0x30] sm:$0xff]
        %v698 = vld [vmem:[%s499 + $0x38] sm:$0xff]
        %v699 = vld [vmem:[%s499 + $0x40] sm:$0xff]
        %v700 = vld [vmem:[%s499 + $0x48] sm:$0xff]
        %v701 = vld [vmem:[%s499 + $0x50] sm:$0xff]
        %v702 = vld [vmem:[%s499 + $0x58] sm:$0xff]
        %v703 = vld [vmem:[%s499 + $0x60] sm:$0xff]
        %v704 = vld [vmem:[%s499 + $0x68] sm:$0xff]
        %v705 = vld [vmem:[%s499 + $0x70] sm:$0xff]
        %v706 = vld [vmem:[%s499 + $0x78] sm:$0xff]
        %707 = vmatprep.subr.mxu0 0.0
        %708 = vmatpush1.msra.mxu0 %v691
        %709 = vmatprep.subr.mxu0 0.0
        %710 = vmatpush1.msra.mxu0 %v692
        %711 = vmatprep.subr.mxu0 0.0
        %712 = vmatpush1.msra.mxu0 %v693
        %713 = vmatprep.subr.mxu0 0.0
        %714 = vmatpush1.msra.mxu0 %v694
        %715 = vmatprep.subr.mxu0 0.0
        %716 = vmatpush1.msra.mxu0 %v695
        %717 = vmatprep.subr.mxu0 0.0
        %718 = vmatpush1.msra.mxu0 %v696
        %719 = vmatprep.subr.mxu0 0.0
        %720 = vmatpush1.msra.mxu0 %v697
        %721 = vmatprep.subr.mxu0 0.0
        %722 = vmatpush1.msra.mxu0 %v698
        %723 = vmatprep.subr.mxu0 0.0
        %724 = vmatpush1.msra.mxu0 %v699
        %725 = vmatprep.subr.mxu0 0.0
        %726 = vmatpush1.msra.mxu0 %v700
        %727 = vmatprep.subr.mxu0 0.0
        %728 = vmatpush1.msra.mxu0 %v701
        %729 = vmatprep.subr.mxu0 0.0
        %730 = vmatpush1.msra.mxu0 %v702
        %731 = vmatprep.subr.mxu0 0.0
        %732 = vmatpush1.msra.mxu0 %v703
        %733 = vmatprep.subr.mxu0 0.0
        %734 = vmatpush1.msra.mxu0 %v704
        %735 = vmatprep.subr.mxu0 0.0
        %736 = vmatpush1.msra.mxu0 %v705
        %737 = vmatprep.subr.mxu0 0.0
        %738 = vmatpush1.msra.mxu0 %v706
        %739 = vmatprep.subr.mxu0 0.0
        %740 = vmatpush1.msra.mxu0 0.0
        %741 = vmatprep.subr.mxu0 0.0
        %742 = vmatpush1.msra.mxu0 0.0
        %743 = vmatprep.subr.mxu0 0.0
        %744 = vmatpush1.msra.mxu0 0.0
        %745 = vmatprep.subr.mxu0 0.0
        %746 = vmatpush1.msra.mxu0 0.0
        %747 = vmatprep.subr.mxu0 0.0
        %748 = vmatpush1.msra.mxu0 0.0
        %749 = vmatprep.subr.mxu0 0.0
        %750 = vmatpush1.msra.mxu0 0.0
        %751 = vmatprep.subr.mxu0 0.0
        %752 = vmatpush1.msra.mxu0 0.0
        %753 = vmatprep.subr.mxu0 0.0
        %754 = vmatpush1.msra.mxu0 0.0
        %755 = vmatprep.subr.mxu0 0.0
        %756 = vmatpush1.msra.mxu0 0.0
        %757 = vmatprep.subr.mxu0 0.0
        %758 = vmatpush1.msra.mxu0 0.0
        %759 = vmatprep.subr.mxu0 0.0
        %760 = vmatpush1.msra.mxu0 0.0
        %761 = vmatprep.subr.mxu0 0.0
        %762 = vmatpush1.msra.mxu0 0.0
        %763 = vmatprep.subr.mxu0 0.0
        %764 = vmatpush1.msra.mxu0 0.0
        %765 = vmatprep.subr.mxu0 0.0
        %766 = vmatpush1.msra.mxu0 0.0
        %767 = vmatprep.subr.mxu0 0.0
        %768 = vmatpush1.msra.mxu0 0.0
        %769 = vmatprep.subr.mxu0 0.0
        %770 = vmatpush1.msra.mxu0 0.0
        %771 = vmatprep.mubr.f32.mxu0 0.0
        %772 = vmatmul.mubr.f32.gmra.mrb[0].mxu0 %v689
        %v773 = vpop.f32.mrb[0].mxu0
        %v774 = vadd.f32 0.0, %v773
        %v775 = vpop.f32.mrb[0].mxu0
        %776 = vdwg.mxu0
        %v777 = vadd.f32 %v690, %v774
        %vm778 = vcmask 7168
        %779 = vst.msk [vmem:[#allocation2] sm:$0xff] %vm778, %v777
        // Predicated region
        $region65: #{tpu_custom_call.1} parent=51 // pred_check
          %p780 = pneg %p512
        $region66: #{tpu_custom_call.1} parent=51 // pred_check_branch
          %782 = sbr.rel (%p780) target = $region68
        $region67: #{tpu_custom_call.1} parent=51 // pred_region
          %v783 = vld [vmem:[#allocation2] sm:$0xff]
          %s784 = sld [smem:[#allocation6 + %s29]]
          %v785 = vstv %s784
          %v786 = vadd.f32 %v783, %v785
          %787 = vst.msk [vmem:[%s508] sm:$0xff] %vm778, %v786
          %v788 = vld [vmem:[%s504] sm:$0xff]
          %v789 = vsub.f32 %v786, %v788
          %v790 = vlaneseq
          %v791 = vshrl.u32 %v790, 7
          %vm792 = vcmp.lt.s32.totalorder %v791, 2
          %v793 = vsel %vm792, %v789, 0.0
          %v794 = vmul.f32 %v793, %v793
          %v795 = vsel %vm778, %v794, 0.0
          %796 = vadd.xlane.f32.xlu0 %v795
          %v797 = vpop.xlane.xlu0 %796
          %v798 = vrot.slane %v797, 4
          %v799 = vadd.f32 %v797, %v798
          %v800 = vrot.slane %v799, 2
          %v801 = vadd.f32 %v799, %v800
          %v802 = vrot.slane %v801, 1
          %v803 = vadd.f32 %v801, %v802
          %s804 = vtos %v803
          %v805 = vstv %s804
          %vm806 = vcmask 0
          %807 = vst.msk [vmem:[%s511] sm:$0x1] %vm806, %v805
        $region68: #{tpu_custom_call.1} parent=51 // pred_fallthru
          _
        %p808 = scmp.lt.s32.totalorder %s29, 3
        %s809 = scalar_select %p808, %s29, 3
        %s810 = smul.addr %s809, 8
        %s811 = scalar_lea.vmem %s8, %s810
        %p812 = scmp.lt.s32.totalorder %s29, 3
        %s813 = scalar_select %p812, %s29, 3
        %s814 = scalar_lea.vmem %s9, %s813
        // Predicated region
        $region69: #{tpu_custom_call.1} parent=51 // pred_check
          %p815 = pneg %p261
        $region70: #{tpu_custom_call.1} parent=51 // pred_check_branch
          %817 = sbr.rel (%p815) target = $region72
        $region71: #{tpu_custom_call.1} parent=51 // pred_region
          _
        $region72: #{tpu_custom_call.1} parent=51 // pred_fallthru
          _
        // Predicated region
        $region73: #{tpu_custom_call.1} parent=51 // pred_check
          %p818 = pneg %p287
        $region74: #{tpu_custom_call.1} parent=51 // pred_check_branch
          %820 = sbr.rel (%p818) target = $region76
        $region75: #{tpu_custom_call.1} parent=51 // pred_region
          _
        $region76: #{tpu_custom_call.1} parent=51 // pred_fallthru
          _
      $region52: #{tpu_custom_call.1} parent=5 // pred_fallthru
        _
      %p821 = scmp.le.s32.totalorder 2, %s20
      // Predicated region
      $region77: #{tpu_custom_call.1} parent=5 // pred_check
        %p822 = pneg %p821
      $region78: #{tpu_custom_call.1} parent=5 // pred_check_branch
        %824 = sbr.rel (%p822) target = $region80
      $region79: #{tpu_custom_call.1} parent=5 // pred_region
        %s825 = ssub.s32 %s20, 2
        // Predicated region
        $region81: #{tpu_custom_call.1} parent=79 // pred_check
          %p826 = pneg %p267
        $region82: #{tpu_custom_call.1} parent=79 // pred_check_branch
          %828 = sbr.rel (%p826) target = $region84
        $region83: #{tpu_custom_call.1} parent=79 // pred_region
          %p829 = scmp.lt.s32.totalorder %s31, 3
          %s830 = scalar_select %p829, %s31, 3
          %s831 = smul.addr %s830, 8
          %s832 = scalar_lea.vmem %s8, %s831
        $region84: #{tpu_custom_call.1} parent=79 // pred_fallthru
          _
        // Predicated region
        $region85: #{tpu_custom_call.1} parent=79 // pred_check
          %p833 = pneg %p293
        $region86: #{tpu_custom_call.1} parent=79 // pred_check_branch
          %835 = sbr.rel (%p833) target = $region88
        $region87: #{tpu_custom_call.1} parent=79 // pred_region
          %p836 = scmp.lt.s32.totalorder %s31, 3
          %s837 = scalar_select %p836, %s31, 3
          %s838 = scalar_lea.vmem %s9, %s837
        $region88: #{tpu_custom_call.1} parent=79 // pred_fallthru
          _
      $region80: #{tpu_custom_call.1} parent=5 // pred_fallthru
        _
    $region6: #{tpu_custom_call.1} parent=1 // loop_footer
      %s24 = sadd.s32 1, %s20
    $region7: #{tpu_custom_call.1} parent=1 // loop_footer_branch
      %19 = sbr.rel target = $region3
    $region8: #{tpu_custom_call.1} parent=1 // loop_exit
      _
    %839 = vsyncpa [#allocation4], 1
    %s840 = scalar_lea.sflag [#allocation4], 1
    %841 = vsyncpa %s840, 1
    %842 = vsyncpa [#allocation5], 1
    %s843 = scalar_lea.sflag [#allocation5], 1
    %844 = vsyncpa %s843, 1

</llo_original>
